<compile_context>
chip_gen: v6e
topology: v6e:2x2x1
jax: 0.10.0
libtpu: 0.0.40
codegen_flags: <defaults>
</compile_context>

<pallas_src>
import jax
import jax.numpy as jnp
from jax import lax
from jax.experimental import pallas as pl
from jax.experimental.pallas import tpu as pltpu


def _round_up(a, b):
    return (a + b - 1) // b * b


# ------------------- pass 1: conv matmul + per-channel batch statistics -------------------
def _conv_stats_kernel(p_ref, w_ref, conv_ref, sum_ref, sumsq_ref, sum_scr, sumsq_scr):
    # p_ref: (1, Kp, THW) im2col tile; w_ref: (Cout, Kp); conv_ref: (1, Cout, THW)
    acc = jnp.dot(w_ref[...], p_ref[0], preferred_element_type=jnp.float32)  # (Cout, THW) f32
    conv_ref[0] = acc.astype(conv_ref.dtype)                                 # bf16 staging

    n, t = pl.program_id(0), pl.program_id(1)

    @pl.when(jnp.logical_and(n == 0, t == 0))
    def _():
        sum_scr[...] = jnp.zeros_like(sum_scr)
        sumsq_scr[...] = jnp.zeros_like(sumsq_scr)

    sum_scr[...] += jnp.sum(acc, axis=1, keepdims=True)
    sumsq_scr[...] += jnp.sum(acc * acc, axis=1, keepdims=True)

    @pl.when(jnp.logical_and(n == pl.num_programs(0) - 1,
                             t == pl.num_programs(1) - 1))
    def _():
        sum_ref[...] = sum_scr[...]
        sumsq_ref[...] = sumsq_scr[...]


# --------------------------- pass 2: fused BN (one FMA) + PReLU ---------------------------
def _bn_prelu_kernel(conv_ref, scale_ref, shift_ref, alpha_ref, out_ref):
    y = conv_ref[0].astype(jnp.float32) * scale_ref[...] + shift_ref[...]
    out_ref[0] = jnp.where(y > 0, y, alpha_ref[...] * y).astype(out_ref.dtype)


def cbr_forward(x_nchw, weight, gamma, beta, alpha, *, stride=1, eps=1e-3,
                compute_dtype=jnp.bfloat16):
    """x_nchw: (N, Cin, H, W); weight: (Cout, Cin, kH, kW) (PyTorch layouts)."""
    N, Cin, H, W = x_nchw.shape
    Cout, _, kH, kW = weight.shape
    pad = (kH - 1) // 2
    Ho = (H + 2 * pad - kH) // stride + 1
    Wo = (W + 2 * pad - kW) // stride + 1
    HW = Ho * Wo
    K = kH * kW * Cin
    Kp = _round_up(K, 8)

    # Lane tiling over flattened per-image spatial positions. Large tiles amortize the
    # per-grid-step fixed cost; the cap keeps the double-buffered patch tile well under
    # the default scoped-VMEM budget on every generation (v7x included).
    itemsize = jnp.dtype(compute_dtype).itemsize
    max_tile_bytes = 8 * 1024 * 1024
    thw_cap = max(128, (max_tile_bytes // (Kp * itemsize)) // 128 * 128)
    THW = min(2048, thw_cap, _round_up(HW, 128))
    HWp = _round_up(HW, THW)
    grid_hw = HWp // THW
    M_total = N * HW  # true element count per channel for batch statistics

    # ------- wrapper glue: NCHW im2col, K ordered (Cin, kH, kW) like weight.reshape -------
    x_c = x_nchw.astype(compute_dtype)
    x_pad = jnp.pad(x_c, ((0, 0), (0, 0), (pad, pad), (pad, pad)))
    taps = []
    for kh in range(kH):
        for kw in range(kW):
            taps.append(lax.slice(
                x_pad, (0, 0, kh, kw),
                (N, Cin, kh + stride * (Ho - 1) + 1, kw + stride * (Wo - 1) + 1),
                (1, 1, stride, stride)))                       # (N, Cin, Ho, Wo)
    patches = jnp.stack(taps, axis=2)                          # (N, Cin, kH*kW, Ho, Wo)
    patches = patches.reshape(N, K, HW)                        # K order = (Cin, kH, kW)
    # Zero padding keeps batch stats exact: padded columns contribute 0 to the sums and
    # the divide below uses the true M_total, not the padded count.
    patches = jnp.pad(patches, ((0, 0), (0, Kp - K), (0, HWp - HW)))

    w2 = weight.reshape(Cout, K).astype(compute_dtype)
    w2 = jnp.pad(w2, ((0, 0), (0, Kp - K)))

    # ---------------- pass 1: conv + per-channel sum / sum-of-squares ----------------
    conv_flat, sums, sumsqs = pl.pallas_call(
        _conv_stats_kernel,
        out_shape=(jax.ShapeDtypeStruct((N, Cout, HWp), compute_dtype),
                   jax.ShapeDtypeStruct((Cout, 1), jnp.float32),
                   jax.ShapeDtypeStruct((Cout, 1), jnp.float32)),
        grid_spec=pltpu.PrefetchScalarGridSpec(
            num_scalar_prefetch=0,
            grid=(N, grid_hw),
            in_specs=[pl.BlockSpec((1, Kp, THW), lambda n, t: (n, 0, t)),
                      pl.BlockSpec((Cout, Kp), lambda n, t: (0, 0))],
            out_specs=[pl.BlockSpec((1, Cout, THW), lambda n, t: (n, 0, t)),
                       pl.BlockSpec((Cout, 1), lambda n, t: (0, 0)),
                       pl.BlockSpec((Cout, 1), lambda n, t: (0, 0))],
            scratch_shapes=[pltpu.VMEM((Cout, 1), jnp.float32),
                            pltpu.VMEM((Cout, 1), jnp.float32)]),
        compiler_params=pltpu.CompilerParams(
            dimension_semantics=("arbitrary", "arbitrary")),   # carried stats accumulator
    )(patches, w2)

    # ------- hoisted BN parameter math: one tiny (Cout,)-sized op between passes -------
    inv_m = 1.0 / float(M_total)
    mean = sums * inv_m
    var = sumsqs * inv_m - mean * mean                         # biased (train-mode) variance
    scale = gamma.reshape(Cout, 1).astype(jnp.float32) * lax.rsqrt(var + eps)
    shift = beta.reshape(Cout, 1).astype(jnp.float32) - mean * scale
    alpha2 = alpha.reshape(Cout, 1).astype(jnp.float32)

    # ------------- pass 2: fused BN (single FMA) + PReLU, direct NCHW output -------------
    out_full = pl.pallas_call(
        _bn_prelu_kernel,
        out_shape=jax.ShapeDtypeStruct((N, Cout, HWp), x_nchw.dtype),
        grid_spec=pltpu.PrefetchScalarGridSpec(
            num_scalar_prefetch=0,
            grid=(N, grid_hw),
            in_specs=[pl.BlockSpec((1, Cout, THW), lambda n, t: (n, 0, t)),
                      pl.BlockSpec((Cout, 1), lambda n, t: (0, 0)),
                      pl.BlockSpec((Cout, 1), lambda n, t: (0, 0)),
                      pl.BlockSpec((Cout, 1), lambda n, t: (0, 0))],
            out_specs=pl.BlockSpec((1, Cout, THW), lambda n, t: (n, 0, t))),
        compiler_params=pltpu.CompilerParams(
            dimension_semantics=("parallel", "parallel")),     # independent tiles
    )(conv_flat, scale, shift, alpha2)

    # HWp == HW in the common case; then the slice is a no-op and the reshape is metadata.
    return out_full[:, :, :HW].reshape(N, Cout, Ho, Wo)


def _reference(x_nchw, weight, gamma, beta, alpha, *, stride=1, eps=1e-3):
    """Pure-JAX reference reproducing the PyTorch forward (train-mode BN, biased var)."""
    pad = (weight.shape[2] - 1) // 2
    conv = lax.conv_general_dilated(
        x_nchw.astype(jnp.float32), weight.astype(jnp.float32),
        window_strides=(stride, stride), padding=((pad, pad), (pad, pad)),
        dimension_numbers=("NCHW", "OIHW", "NCHW"))
    mean = jnp.mean(conv, axis=(0, 2, 3), keepdims=True)
    var = jnp.mean((conv - mean) ** 2, axis=(0, 2, 3), keepdims=True)
    y = (conv - mean) * lax.rsqrt(var + eps) * gamma.reshape(1, -1, 1, 1) \
        + beta.reshape(1, -1, 1, 1)
    a = alpha.reshape(1, -1, 1, 1)
    return jnp.where(y > 0, y, a * y).astype(x_nchw.dtype)


if __name__ == "__main__":
    # Small shapes consistent with the module: nIn=4, nOut=8, kSize=3, stride=1.
    N, Cin, H, W = 2, 4, 16, 16
    Cout, kSize, stride = 8, 3, 1

    key = jax.random.PRNGKey(0)
    kx, kw = jax.random.split(key)
    x = jax.random.normal(kx, (N, Cin, H, W), dtype=jnp.float32)

    # Deterministic synthetic parameters matching PyTorch shapes/init conventions:
    #   conv.weight: (Cout, Cin, k, k), bn.weight=1, bn.bias=0, prelu.weight=0.25
    fan_in = Cin * kSize * kSize
    weight = jax.random.normal(kw, (Cout, Cin, kSize, kSize), dtype=jnp.float32)
    weight = weight * (2.0 / fan_in) ** 0.5
    gamma = jnp.ones((Cout,), jnp.float32)
    beta = jnp.zeros((Cout,), jnp.float32)
    alpha = jnp.full((Cout,), 0.25, jnp.float32)

    # eps=1e-3 matches nn.BatchNorm2d(nOut, eps=0.001) in the module.
    ref = _reference(x, weight, gamma, beta, alpha, stride=stride, eps=1e-3)

    # f32 compute path: tight check against the pure-JAX reference.
    out_f32 = cbr_forward(x, weight, gamma, beta, alpha, stride=stride, eps=1e-3,
                          compute_dtype=jnp.float32)
    out_f32 = jax.block_until_ready(out_f32)
    assert out_f32.shape == (N, Cout, H, W), out_f32.shape
    assert jnp.allclose(out_f32, ref, rtol=1e-4, atol=1e-4), \
        float(jnp.max(jnp.abs(out_f32 - ref)))

    # bf16 compute path (the perf-optimized default): tolerance sized for bf16 rounding
    # of the patch/weight operands and the bf16-staged conv intermediate.
    out_bf16 = cbr_forward(x, weight, gamma, beta, alpha, stride=stride, eps=1e-3,
                           compute_dtype=jnp.bfloat16)
    out_bf16 = jax.block_until_ready(out_bf16)
    assert out_bf16.shape == (N, Cout, H, W), out_bf16.shape
    assert jnp.allclose(out_bf16, ref, rtol=5e-2, atol=5e-2), \
        float(jnp.max(jnp.abs(out_bf16 - ref)))

    # TODO(synk): BatchNorm running_mean/running_var update (momentum=0.1) is training
    # state, not part of the forward output, so it is not computed here.
    print("KERNEL_OK")
</pallas_src>

<mosaic_0001>
module attributes {stable_mosaic.version = 11 : i64} {
  func.func @_conv_stats_kernel(%arg0: i32, %arg1: i32, %arg2: memref<1x40x256xf32, #tpu.memory_space<vmem>>, %arg3: memref<8x40xf32, #tpu.memory_space<vmem>>, %arg4: memref<1x8x256xf32, #tpu.memory_space<vmem>>, %arg5: memref<8x1xf32, #tpu.memory_space<vmem>>, %arg6: memref<8x1xf32, #tpu.memory_space<vmem>>, %arg7: memref<8x1xf32, #tpu.memory_space<vmem>>, %arg8: memref<8x1xf32, #tpu.memory_space<vmem>>) attributes {dimension_semantics = [#tpu.dimension_semantics<arbitrary>, #tpu.dimension_semantics<arbitrary>], iteration_bounds = array<i64: 2, 1>, scalar_prefetch = 0 : i64, scratch_operands = 2 : i64, tpu.core_type = #tpu.core_type<tc>, window_params = [{transform_indices = @transform_0, window_bounds = array<i64: 1, 40, 256>}, {pipeline_mode = #tpu.pipeline_mode<synchronous>, transform_indices = @transform_1, window_bounds = array<i64: 8, 40>}, {transform_indices = @transform_2, window_bounds = array<i64: 1, 8, 256>}, {pipeline_mode = #tpu.pipeline_mode<synchronous>, transform_indices = @transform_3, window_bounds = array<i64: 8, 1>}, {pipeline_mode = #tpu.pipeline_mode<synchronous>, transform_indices = @transform_4, window_bounds = array<i64: 8, 1>}]} {
    %c0 = arith.constant 0 : index
    %c0_0 = arith.constant 0 : index
    %0 = vector.load %arg3[%c0, %c0_0] : memref<8x40xf32, #tpu.memory_space<vmem>>, vector<8x40xf32>
    %c0_1 = arith.constant 0 : index
    %c0_2 = arith.constant 0 : index
    %c0_3 = arith.constant 0 : index
    %1 = vector.load %arg2[%c0_1, %c0_2, %c0_3] : memref<1x40x256xf32, #tpu.memory_space<vmem>>, vector<1x40x256xf32>
    %2 = vector.shape_cast %1 : vector<1x40x256xf32> to vector<40x256xf32>
    %cst = arith.constant dense<0.000000e+00> : vector<8x256xf32>
    %3 = tpu.matmul %0, %2, %cst {dimension_numbers = #tpu.dot_dimension_numbers<[1], [0], [0], [1], [0, 0, 1, 1], [], []>} : vector<8x40xf32>, vector<40x256xf32>, vector<8x256xf32> -> vector<8x256xf32>
    %c0_4 = arith.constant 0 : index
    %c0_5 = arith.constant 0 : index
    %c0_6 = arith.constant 0 : index
    %4 = vector.load %arg4[%c0_4, %c0_5, %c0_6] : memref<1x8x256xf32, #tpu.memory_space<vmem>>, vector<1x8x256xf32>
    %5 = vector.shape_cast %4 : vector<1x8x256xf32> to vector<8x256xf32>
    %6 = vector.shape_cast %3 : vector<8x256xf32> to vector<1x8x256xf32>
    tpu.vector_store %arg4[%c0_4, %c0_5, %c0_6], %6 {strides = array<i32>} : memref<1x8x256xf32, #tpu.memory_space<vmem>>, vector<1x8x256xf32>,
    %c0_i32 = arith.constant 0 : i32
    %7 = arith.cmpi eq, %arg0, %c0_i32 : i32
    %c0_i32_7 = arith.constant 0 : i32
    %8 = arith.cmpi eq, %arg1, %c0_i32_7 : i32
    %9 = arith.andi %7, %8 : i1
    %10 = arith.extui %9 : i1 to i32
    %c0_i32_8 = arith.constant 0 : i32
    %11 = arith.cmpi ne, %10, %c0_i32_8 : i32
    scf.if %11 {
      %cst_21 = arith.constant 0.000000e+00 : f32
      %28 = vector.broadcast %cst_21 : f32 to vector<8x1xf32>
      %c0_22 = arith.constant 0 : index
      %c0_23 = arith.constant 0 : index
      %29 = vector.load %arg7[%c0_22, %c0_23] : memref<8x1xf32, #tpu.memory_space<vmem>>, vector<8x1xf32>
      tpu.vector_store %arg7[%c0_22, %c0_23], %28 {strides = array<i32>} : memref<8x1xf32, #tpu.memory_space<vmem>>, vector<8x1xf32>,
      %cst_24 = arith.constant 0.000000e+00 : f32
      %30 = vector.broadcast %cst_24 : f32 to vector<8x1xf32>
      %c0_25 = arith.constant 0 : index
      %c0_26 = arith.constant 0 : index
      %31 = vector.load %arg8[%c0_25, %c0_26] : memref<8x1xf32, #tpu.memory_space<vmem>>, vector<8x1xf32>
      tpu.vector_store %arg8[%c0_25, %c0_26], %30 {strides = array<i32>} : memref<8x1xf32, #tpu.memory_space<vmem>>, vector<8x1xf32>,
    } else {
    }
    %c0_9 = arith.constant 0 : index
    %c0_10 = arith.constant 0 : index
    %12 = vector.load %arg7[%c0_9, %c0_10] : memref<8x1xf32, #tpu.memory_space<vmem>>, vector<8x1xf32>
    %cst_11 = arith.constant dense<0.000000e+00> : vector<8xf32>
    %13 = vector.multi_reduction <add>, %3, %cst_11 [1] : vector<8x256xf32> to vector<8xf32>
    %14 = vector.shape_cast %13 : vector<8xf32> to vector<8x1xf32>
    %15 = arith.addf %12, %14 : vector<8x1xf32>
    %c0_12 = arith.constant 0 : index
    %c0_13 = arith.constant 0 : index
    %16 = vector.load %arg7[%c0_12, %c0_13] : memref<8x1xf32, #tpu.memory_space<vmem>>, vector<8x1xf32>
    tpu.vector_store %arg7[%c0_12, %c0_13], %15 {strides = array<i32>} : memref<8x1xf32, #tpu.memory_space<vmem>>, vector<8x1xf32>,
    %c0_14 = arith.constant 0 : index
    %c0_15 = arith.constant 0 : index
    %17 = vector.load %arg8[%c0_14, %c0_15] : memref<8x1xf32, #tpu.memory_space<vmem>>, vector<8x1xf32>
    %18 = arith.mulf %3, %3 : vector<8x256xf32>
    %cst_16 = arith.constant dense<0.000000e+00> : vector<8xf32>
    %19 = vector.multi_reduction <add>, %18, %cst_16 [1] : vector<8x256xf32> to vector<8xf32>
    %20 = vector.shape_cast %19 : vector<8xf32> to vector<8x1xf32>
    %21 = arith.addf %17, %20 : vector<8x1xf32>
    %c0_17 = arith.constant 0 : index
    %c0_18 = arith.constant 0 : index
    %22 = vector.load %arg8[%c0_17, %c0_18] : memref<8x1xf32, #tpu.memory_space<vmem>>, vector<8x1xf32>
    tpu.vector_store %arg8[%c0_17, %c0_18], %21 {strides = array<i32>} : memref<8x1xf32, #tpu.memory_space<vmem>>, vector<8x1xf32>,
    %c1_i32 = arith.constant 1 : i32
    %23 = arith.cmpi eq, %arg0, %c1_i32 : i32
    %c0_i32_19 = arith.constant 0 : i32
    %24 = arith.cmpi eq, %arg1, %c0_i32_19 : i32
    %25 = arith.andi %23, %24 : i1
    %26 = arith.extui %25 : i1 to i32
    %c0_i32_20 = arith.constant 0 : i32
    %27 = arith.cmpi ne, %26, %c0_i32_20 : i32
    scf.if %27 {
      %c0_21 = arith.constant 0 : index
      %c0_22 = arith.constant 0 : index
      %28 = vector.load %arg7[%c0_21, %c0_22] : memref<8x1xf32, #tpu.memory_space<vmem>>, vector<8x1xf32>
      %c0_23 = arith.constant 0 : index
      %c0_24 = arith.constant 0 : index
      %29 = vector.load %arg5[%c0_23, %c0_24] : memref<8x1xf32, #tpu.memory_space<vmem>>, vector<8x1xf32>
      tpu.vector_store %arg5[%c0_23, %c0_24], %28 {strides = array<i32>} : memref<8x1xf32, #tpu.memory_space<vmem>>, vector<8x1xf32>,
      %c0_25 = arith.constant 0 : index
      %c0_26 = arith.constant 0 : index
      %30 = vector.load %arg8[%c0_25, %c0_26] : memref<8x1xf32, #tpu.memory_space<vmem>>, vector<8x1xf32>
      %c0_27 = arith.constant 0 : index
      %c0_28 = arith.constant 0 : index
      %31 = vector.load %arg6[%c0_27, %c0_28] : memref<8x1xf32, #tpu.memory_space<vmem>>, vector<8x1xf32>
      tpu.vector_store %arg6[%c0_27, %c0_28], %30 {strides = array<i32>} : memref<8x1xf32, #tpu.memory_space<vmem>>, vector<8x1xf32>,
    } else {
    }
    return
  }
  func.func @transform_0(%arg0: i32, %arg1: i32) -> (i32, i32, i32) {
    %c0_i32 = arith.constant 0 : i32
    %c0_i32_0 = arith.constant 0 : i32
    return %arg0, %c0_i32, %arg1 : i32, i32, i32
  }
  func.func @transform_1(%arg0: i32, %arg1: i32) -> (i32, i32) {
    %c0_i32 = arith.constant 0 : i32
    %c0_i32_0 = arith.constant 0 : i32
    %c0_i32_1 = arith.constant 0 : i32
    return %c0_i32, %c0_i32_0 : i32, i32
  }
  func.func @transform_2(%arg0: i32, %arg1: i32) -> (i32, i32, i32) {
    %c0_i32 = arith.constant 0 : i32
    %c0_i32_0 = arith.constant 0 : i32
    return %arg0, %c0_i32, %arg1 : i32, i32, i32
  }
  func.func @transform_3(%arg0: i32, %arg1: i32) -> (i32, i32) {
    %c0_i32 = arith.constant 0 : i32
    %c0_i32_0 = arith.constant 0 : i32
    %c0_i32_1 = arith.constant 0 : i32
    return %c0_i32, %c0_i32_0 : i32, i32
  }
  func.func @transform_4(%arg0: i32, %arg1: i32) -> (i32, i32) {
    %c0_i32 = arith.constant 0 : i32
    %c0_i32_0 = arith.constant 0 : i32
    %c0_i32_1 = arith.constant 0 : i32
    return %c0_i32, %c0_i32_0 : i32, i32
  }
}

</mosaic_0001>

<llo_original>
// kernel: tpu_custom_call.1
$region0: #{tpu_custom_call.1}
  #allocation0 [shape = 'u32[]', space=smem, size = 0x4, offset = 0x4, fixed_abs, tag = 'smem constant byte address 0x4 - core index']
  #allocation1 [shape = 'u32[144,128]{1,0:T(1,128)}', space=vmem, size = 0x12000, scoped, tag = 'internal scratch']
  #allocation2 [shape = 'f32[8,1]{1,0:T(8,128)}', space=vmem, size = 0x1000, scoped, tag = 'scratch operand']
  #allocation3 [shape = 'f32[8,1]{1,0:T(8,128)}', space=vmem, size = 0x1000, scoped, tag = 'scratch operand']
  %s0 = inlined_call_operand.hbm [shape: f32[2,40,256], index: 0, kind: input, shape index: {}]
  %s1 = inlined_call_operand.hbm [shape: f32[8,40], index: 1, kind: input, shape index: {}]
  %s2 = inlined_call_operand.hbm [shape: f32[2,8,256], index: 2, kind: output, shape index: {0}]
  %s3 = inlined_call_operand.vmem [shape: f32[8,1], index: 3, kind: output, shape index: {1}]
  %s4 = inlined_call_operand.vmem [shape: f32[8,1], index: 4, kind: output, shape index: {2}]
  %5 = xla_tuple %s2, %s3, %s4
  %s6 = sld [smem:[#allocation0]]
  $region73: #{tpu_custom_call.1} parent=0
    _
  %s8 = ssub.s32 1, %s6
  %s9 = scalar_select 0, %s8, %s6
  $region1: #{tpu_custom_call.1} parent=0
    #allocation4 [shape = 'u8[81920]{0}', space=vmem, size = 0x14000, scoped, tag = 'input window, operand 0']
    #allocation5 [shape = 's32[2]{0}', space=sflag, size = 0x8, scoped, tag = 'scoped memory for tpu_custom_call.1']
    #allocation6 [shape = 's32[2]{0}', space=sflag, size = 0x8, scoped, tag = 'scoped memory for tpu_custom_call.1']
    #allocation7 [shape = 'u8[4096]{0}', space=vmem, size = 0x1000, scoped, tag = 'input window, operand 1, single buffered']
    #allocation8 [shape = 's32[1]{0}', space=sflag, size = 0x4, scoped, tag = 'scoped memory for tpu_custom_call.1']
    #allocation9 [shape = 'u8[16384]{0}', space=vmem, size = 0x4000, scoped, tag = 'output window, operand 0']
    %10 = vsyncpa [#allocation5], 0
    %s11 = scalar_lea.sflag [#allocation5], 1
    %12 = vsyncpa %s11, 0
    %13 = vsyncpa [#allocation8], 0
    %14 = vsyncpa [#allocation6], 0
    %s15 = scalar_lea.sflag [#allocation6], 1
    %16 = vsyncpa %s15, 0
    loop: start=0, step=1, limit=4
    $region2: #{tpu_custom_call.1} parent=1 // loop_pre_header
      _
    $region3: #{tpu_custom_call.1} parent=1 // loop_header
      %s18 = sphi 0, %s22
      %p19 = scmp.ge.s32.totalorder %s18, 4
      %s25 = sphi 0, %s37
      %s26 = sphi 0, %s33
      %s27 = sphi 0, %s25
      %s28 = sphi 0, %s26
      %s29 = sphi 0, %s27
      %s30 = sphi 0, %s28
      %s42 = sphi 0, %s44
      %s45 = sphi 0, %s42
      %s46 = sphi 0, %s45
      %s62 = sphi 0, %s46
      %s66 = sphi 0, %s66
      %s68 = sphi 0, %s66
      %s69 = sphi 0, %s68
      %s83 = sphi 0, %s69
      %s91 = sphi 0, %s93
      %s94 = sphi 0, %s91
      %s95 = sphi 0, %s94
      %s111 = sphi 0, %s95
      %s115 = sphi 0, %s115
      %s117 = sphi 0, %s115
      %s118 = sphi 0, %s117
      %s132 = sphi 0, %s118
      %s136 = sphi 0, %s136
      %s138 = sphi 0, %s136
      %s139 = sphi 0, %s138
      %s153 = sphi 0, %s139
    $region4: #{tpu_custom_call.1} parent=1 // loop_header_branch
      %21 = sbr.rel (%p19) target = $region8
    $region5: #{tpu_custom_call.1} parent=1 // loop_body
      %s23 = ssub.s32 %s18, 1
      %s24 = ssub.s32 %s18, 2
      %s31 = sadd.s32 1, %s26
      %p32 = scmp.ge.s32.totalorder %s31, 1
      %s33 = scalar_select %p32, 0, %s31
      %s34 = sadd.s32 1, %s25
      %s35 = scalar_select %p32, %s34, %s25
      %p36 = scmp.ge.s32.totalorder %s35, 2
      %s37 = scalar_select %p36, 0, %s35
      %s38 = ssub.s32 %s25, %s37
      %s39 = ssub.s32 %s26, %s33
      %s40 = sor.u32 %s38, %s39
      %p41 = scmp.eq.s32.totalorder %s40, 0
      %s43 = sadd.s32 %s42, 1
      %s44 = scalar_select %p41, %s42, %s43
      %p47 = pneg %p41
      %p48 = scmp.eq.s32.totalorder %s18, 1
      %p49 = por %p47, %p48
      %p50 = scmp.ne.s32.totalorder %s42, %s45
      %p51 = scmp.eq.s32.totalorder %s18, 0
      %p52 = por %p50, %p51
      %p53 = scmp.ne.s32.totalorder %s42, %s45
      %p54 = scmp.eq.s32.totalorder %s23, 1
      %p55 = por %p53, %p54
      %p56 = scmp.ne.s32.totalorder %s45, %s46
      %p57 = scmp.eq.s32.totalorder %s23, 0
      %p58 = por %p56, %p57
      %p59 = scmp.ne.s32.totalorder %s45, %s46
      %p60 = scmp.eq.s32.totalorder %s24, 1
      %p61 = por %p59, %p60
      %p63 = scmp.ne.s32.totalorder %s46, %s62
      %p64 = scmp.eq.s32.totalorder %s24, 0
      %p65 = por %p63, %p64
      %s67 = sadd.s32 %s66, 1
      %p70 = scmp.eq.s32.totalorder %s18, 1
      %p71 = scmp.ne.s32.totalorder %s66, %s68
      %p72 = scmp.eq.s32.totalorder %s18, 0
      %p73 = por %p71, %p72
      %p74 = scmp.ne.s32.totalorder %s66, %s68
      %p75 = scmp.eq.s32.totalorder %s23, 1
      %p76 = por %p74, %p75
      %p77 = scmp.ne.s32.totalorder %s68, %s69
      %p78 = scmp.eq.s32.totalorder %s23, 0
      %p79 = por %p77, %p78
      %p80 = scmp.ne.s32.totalorder %s68, %s69
      %p81 = scmp.eq.s32.totalorder %s24, 1
      %p82 = por %p80, %p81
      %p84 = scmp.ne.s32.totalorder %s69, %s83
      %p85 = scmp.eq.s32.totalorder %s24, 0
      %p86 = por %p84, %p85
      %s87 = ssub.s32 %s25, %s37
      %s88 = ssub.s32 %s26, %s33
      %s89 = sor.u32 %s87, %s88
      %p90 = scmp.eq.s32.totalorder %s89, 0
      %s92 = sadd.s32 %s91, 1
      %s93 = scalar_select %p90, %s91, %s92
      %p96 = pneg %p90
      %p97 = scmp.eq.s32.totalorder %s18, 1
      %p98 = por %p96, %p97
      %p99 = scmp.ne.s32.totalorder %s91, %s94
      %p100 = scmp.eq.s32.totalorder %s18, 0
      %p101 = por %p99, %p100
      %p102 = scmp.ne.s32.totalorder %s91, %s94
      %p103 = scmp.eq.s32.totalorder %s23, 1
      %p104 = por %p102, %p103
      %p105 = scmp.ne.s32.totalorder %s94, %s95
      %p106 = scmp.eq.s32.totalorder %s23, 0
      %p107 = por %p105, %p106
      %p108 = scmp.ne.s32.totalorder %s94, %s95
      %p109 = scmp.eq.s32.totalorder %s24, 1
      %p110 = por %p108, %p109
      %p112 = scmp.ne.s32.totalorder %s95, %s111
      %p113 = scmp.eq.s32.totalorder %s24, 0
      %p114 = por %p112, %p113
      %s116 = sadd.s32 %s115, 1
      %p119 = scmp.eq.s32.totalorder %s18, 1
      %p120 = scmp.ne.s32.totalorder %s115, %s117
      %p121 = scmp.eq.s32.totalorder %s18, 0
      %p122 = por %p120, %p121
      %p123 = scmp.ne.s32.totalorder %s115, %s117
      %p124 = scmp.eq.s32.totalorder %s23, 1
      %p125 = por %p123, %p124
      %p126 = scmp.ne.s32.totalorder %s117, %s118
      %p127 = scmp.eq.s32.totalorder %s23, 0
      %p128 = por %p126, %p127
      %p129 = scmp.ne.s32.totalorder %s117, %s118
      %p130 = scmp.eq.s32.totalorder %s24, 1
      %p131 = por %p129, %p130
      %p133 = scmp.ne.s32.totalorder %s118, %s132
      %p134 = scmp.eq.s32.totalorder %s24, 0
      %p135 = por %p133, %p134
      %s137 = sadd.s32 %s136, 1
      %p140 = scmp.eq.s32.totalorder %s18, 1
      %p141 = scmp.ne.s32.totalorder %s136, %s138
      %p142 = scmp.eq.s32.totalorder %s18, 0
      %p143 = por %p141, %p142
      %p144 = scmp.ne.s32.totalorder %s136, %s138
      %p145 = scmp.eq.s32.totalorder %s23, 1
      %p146 = por %p144, %p145
      %p147 = scmp.ne.s32.totalorder %s138, %s139
      %p148 = scmp.eq.s32.totalorder %s23, 0
      %p149 = por %p147, %p148
      %p150 = scmp.ne.s32.totalorder %s138, %s139
      %p151 = scmp.eq.s32.totalorder %s24, 1
      %p152 = por %p150, %p151
      %p154 = scmp.ne.s32.totalorder %s139, %s153
      %p155 = scmp.eq.s32.totalorder %s24, 0
      %p156 = por %p154, %p155
      %p157 = scmp.le.s32.totalorder 1, %s18
      %p158 = scmp.lt.s32.totalorder %s18, 3
      %p159 = pnand %p157, %p158
      %p160 = pneg %p159
      // Predicated region
      $region9: #{tpu_custom_call.1} parent=5 // pred_check
        _
      $region10: #{tpu_custom_call.1} parent=5 // pred_check_branch
        %162 = sbr.rel (%p159) target = $region12
      $region11: #{tpu_custom_call.1} parent=5 // pred_region
        %s163 = ssub.s32 %s18, 1
        // Predicated region
        $region13: #{tpu_custom_call.1} parent=11 // pred_check
          %p164 = pneg %p79
        $region14: #{tpu_custom_call.1} parent=11 // pred_check_branch
          %166 = sbr.rel (%p164) target = $region16
        $region15: #{tpu_custom_call.1} parent=11 // pred_region
          %s168 = ssub.s32 128, 128
          %169 = vsyncadd [#allocation8], %s168
          %s171 = sshll.u32 [#allocation7], 4
          %s172 = int_to_ptr.vmem [resolvable:$true] %s171
          %174 = dma.hbm_to_vmem [thread:$0]  %s1, 128, %s172, [#allocation8]
        $region16: #{tpu_custom_call.1} parent=11 // pred_fallthru
          _
      $region12: #{tpu_custom_call.1} parent=5 // pred_fallthru
        _
      %p175 = scmp.lt.s32.totalorder %s18, 2
      // Predicated region
      $region17: #{tpu_custom_call.1} parent=5 // pred_check
        %p176 = pneg %p175
      $region18: #{tpu_custom_call.1} parent=5 // pred_check_branch
        %178 = sbr.rel (%p176) target = $region20
      $region19: #{tpu_custom_call.1} parent=5 // pred_region
        // Predicated region
        $region21: #{tpu_custom_call.1} parent=19 // pred_check
          %p179 = pneg %p52
        $region22: #{tpu_custom_call.1} parent=19 // pred_check_branch
          %181 = sbr.rel (%p179) target = $region24
        $region23: #{tpu_custom_call.1} parent=19 // pred_region
          %s182 = sand.u32 %s42, 1
          %s183 = scalar_lea.sflag [#allocation5], %s182
          %s184 = sand.u32 %s42, 1
          %s185 = smul.addr %s184, 80
          %s186 = scalar_lea.vmem [#allocation4], %s185
          %s187 = smul.u32 2, %s26
          %s189 = ssub.s32 1280, 1280
          %190 = vsyncadd %s183, %s189
          %s191 = smul.addr %s25, 10
          %s192 = sadd.s32 %s187, %s191
          %s193 = smul.addr %s192, 128
          %s194 = scalar_lea.hbm %s0, %s193
          %s195 = sshll.u32 %s186, 4
          %s196 = int_to_ptr.vmem [resolvable:$true] %s195
          %201 = dma.hbm_to_vmem [thread:$0]  %s194, 1280, %s196, %s183, 256, 256, 16
        $region24: #{tpu_custom_call.1} parent=19 // pred_fallthru
          _
      $region20: #{tpu_custom_call.1} parent=5 // pred_fallthru
        _
      %p202 = scmp.le.s32.totalorder 1, %s18
      %p203 = scmp.lt.s32.totalorder %s18, 3
      %p204 = pnand %p202, %p203
      %p205 = pneg %p204
      // Predicated region
      $region25: #{tpu_custom_call.1} parent=5 // pred_check
        _
      $region26: #{tpu_custom_call.1} parent=5 // pred_check_branch
        %207 = sbr.rel (%p204) target = $region28
      $region27: #{tpu_custom_call.1} parent=5 // pred_region
        %s208 = ssub.s32 %s18, 1
        %s209 = sand.u32 %s45, 1
        %s210 = scalar_lea.sflag [#allocation5], %s209
        %s211 = sand.u32 %s45, 1
        %s212 = smul.addr %s211, 80
        %s213 = scalar_lea.vmem [#allocation4], %s212
        // Predicated region
        $region29: #{tpu_custom_call.1} parent=27 // pred_check
          %p214 = pneg %p58
        $region30: #{tpu_custom_call.1} parent=27 // pred_check_branch
          %216 = sbr.rel (%p214) target = $region32
        $region31: #{tpu_custom_call.1} parent=27 // pred_region
          %217 = dma.done %s210, 1280
        $region32: #{tpu_custom_call.1} parent=27 // pred_fallthru
          _
        // Predicated region
        $region33: #{tpu_custom_call.1} parent=27 // pred_check
          %p218 = pneg %p79
        $region34: #{tpu_custom_call.1} parent=27 // pred_check_branch
          %220 = sbr.rel (%p218) target = $region36
        $region35: #{tpu_custom_call.1} parent=27 // pred_region
          %221 = dma.done [#allocation8], 128
        $region36: #{tpu_custom_call.1} parent=27 // pred_fallthru
          _
        %s222 = sand.u32 %s45, 1
        %s223 = scalar_lea.sflag [#allocation5], %s222
        %s224 = sand.u32 %s45, 1
        %s225 = smul.addr %s224, 80
        %s226 = scalar_lea.vmem [#allocation4], %s225
        %p227 = pneg %p58
        %p228 = pneg %p55
        %p229 = pneg %p79
        %p230 = pneg %p76
        %p231 = pneg %p107
        %p232 = pneg %p104
        %s233 = sand.u32 %s94, 1
        %s234 = scalar_lea.sflag [#allocation6], %s233
        %s235 = sand.u32 %s94, 1
        %s236 = smul.addr %s235, 16
        %s237 = scalar_lea.vmem [#allocation9], %s236
        %p238 = pneg %p128
        %p239 = pneg %p125
        %p240 = pneg %p149
        %p241 = pneg %p146
        %s242 = smul.u32 2, %s28
        %s243 = smul.u32 2, %s28
        %v244 = vld [vmem:[#allocation7] sm:$0xff]
        %v245 = vld [vmem:[%s213] sm:$0xff]
        %v246 = vld [vmem:[%s213 + $0x8] sm:$0xff]
        %v247 = vld [vmem:[%s213 + $0x10] sm:$0xff]
        %v248 = vld [vmem:[%s213 + $0x18] sm:$0xff]
        %v249 = vld [vmem:[%s213 + $0x20] sm:$0xff]
        %v250 = vld [vmem:[%s213 + $0x28] sm:$0xff]
        %v251 = vld [vmem:[%s213 + $0x30] sm:$0xff]
        %v252 = vld [vmem:[%s213 + $0x38] sm:$0xff]
        %v253 = vld [vmem:[%s213 + $0x40] sm:$0xff]
        %v254 = vld [vmem:[%s213 + $0x48] sm:$0xff]
        %vm255 = vcmask 326656
        %v257 = vsel %vm255, %v244, 0
        %259 = vmatprep.subr.mxu0 0.0
        %260 = vmatpush1.msra.mxu0 0.0
        %261 = vmatprep.subr.mxu0 0.0
        %262 = vmatpush1.msra.mxu0 0.0
        %263 = vmatprep.subr.mxu0 0.0
        %264 = vmatpush1.msra.mxu0 0.0
        %265 = vmatprep.subr.mxu0 0.0
        %266 = vmatpush1.msra.mxu0 0.0
        %267 = vmatprep.subr.mxu0 0.0
        %268 = vmatpush1.msra.mxu0 0.0
        %269 = vmatprep.subr.mxu0 0.0
        %270 = vmatpush1.msra.mxu0 0.0
        %271 = vmatprep.subr.mxu0 0.0
        %272 = vmatpush1.msra.mxu0 0.0
        %273 = vmatprep.subr.mxu0 0.0
        %274 = vmatpush1.msra.mxu0 0.0
        %275 = vmatprep.subr.mxu0 0.0
        %276 = vmatpush1.msra.mxu0 0.0
        %277 = vmatprep.subr.mxu0 0.0
        %278 = vmatpush1.msra.mxu0 0.0
        %279 = vmatprep.subr.mxu0 0.0
        %280 = vmatpush1.msra.mxu0 0.0
        %281 = vmatprep.subr.mxu0 %v254
        %282 = vmatpush1.msra.mxu0 %v253
        %283 = vmatprep.subr.mxu0 %v252
        %284 = vmatpush1.msra.mxu0 %v251
        %285 = vmatprep.subr.mxu0 %v250
        %286 = vmatpush1.msra.mxu0 %v249
        %287 = vmatprep.subr.mxu0 %v248
        %288 = vmatpush1.msra.mxu0 %v247
        %289 = vmatprep.subr.mxu0 %v246
        %290 = vmatpush1.msra.mxu0 %v245
        %291 = vmatprep.subr.mxu0 0.0
        %292 = vmatpush2.msra.mxu0 0.0
        %293 = vmatprep.subr.mxu0 0.0
        %294 = vmatpush2.msra.mxu0 0.0
        %295 = vmatprep.subr.mxu0 0.0
        %296 = vmatpush2.msra.mxu0 0.0
        %297 = vmatprep.subr.mxu0 0.0
        %298 = vmatpush2.msra.mxu0 0.0
        %299 = vmatprep.subr.mxu0 0.0
        %300 = vmatpush2.msra.mxu0 0.0
        %301 = vmatprep.subr.mxu0 0.0
        %302 = vmatpush2.msra.mxu0 0.0
        %303 = vmatprep.subr.mxu0 0.0
        %304 = vmatpush2.msra.mxu0 0.0
        %305 = vmatprep.subr.mxu0 0.0
        %306 = vmatpush2.msra.mxu0 0.0
        %307 = vmatprep.subr.mxu0 0.0
        %308 = vmatpush2.msra.mxu0 0.0
        %309 = vmatprep.subr.mxu0 0.0
        %310 = vmatpush2.msra.mxu0 0.0
        %311 = vmatprep.subr.mxu0 0.0
        %312 = vmatpush2.msra.mxu0 0.0
        %313 = vmatprep.subr.mxu0 0.0
        %314 = vmatpush2.msra.mxu0 0.0
        %315 = vmatprep.subr.mxu0 0.0
        %316 = vmatpush2.msra.mxu0 0.0
        %317 = vmatprep.subr.mxu0 0.0
        %318 = vmatpush2.msra.mxu0 0.0
        %319 = vmatprep.subr.mxu0 0.0
        %320 = vmatpush2.msra.mxu0 0.0
        %321 = vmatprep.subr.mxu0 0.0
        %322 = vmatpush2.msra.mxu0 0.0
        %323 = vmatprep.mubr.f32.mxu0 0.0
        %324 = vmatmul.mubr.f32.gmra.mxu0 %v257
        %v325 = vpop.f32.mrf.mxu0
        %v326 = vadd.f32 0.0, %v325
        %v327 = vpop.f32.mrf.mxu0
        %v328 = vadd.f32 0.0, %v327
        %329 = vdwg.mxu0
        %330 = vst [vmem:[%s237] sm:$0xff] %v326
        %331 = vst [vmem:[%s237 + $0x8] sm:$0xff] %v328
        %p332 = scmp.eq.s32.totalorder %s27, 0
        %p333 = scmp.eq.s32.totalorder %s28, 0
        %p334 = pnand %p332, %p333
        %p335 = pneg %p334
        // Predicated region
        $region37: #{tpu_custom_call.1} parent=27 // pred_check
          _
        $region38: #{tpu_custom_call.1} parent=27 // pred_check_branch
          %337 = sbr.rel (%p334) target = $region40
        $region39: #{tpu_custom_call.1} parent=27 // pred_region
          %vm338 = vcmask 7168
          %339 = vst.msk [vmem:[#allocation2] sm:$0xff] %vm338, 0.0
          %340 = vst.msk [vmem:[#allocation3] sm:$0xff] %vm338, 0.0
        $region40: #{tpu_custom_call.1} parent=27 // pred_fallthru
          _
        %v341 = vld [vmem:[#allocation2] sm:$0xff]
        %v342 = vadd.f32 %v326, %v328
        %343 = vadd.xlane.f32.xlu0 %v342
        %v344 = vpop.xlane.xlu0 %343
        %v345 = vadd.f32 %v341, %v344
        %vm346 = vcmask 7168
        %347 = vst.msk [vmem:[#allocation2] sm:$0xff] %vm346, %v345
        %v348 = vld [vmem:[#allocation3] sm:$0xff]
        %v349 = vmul.f32 %v326, %v326
        %v350 = vmul.f32 %v328, %v328
        %v351 = vadd.f32 %v349, %v350
        %352 = vadd.xlane.f32.xlu0 %v351
        %v353 = vpop.xlane.xlu0 %352
        %v354 = vadd.f32 %v348, %v353
        %355 = vst.msk [vmem:[#allocation3] sm:$0xff] %vm346, %v354
        %p356 = scmp.eq.s32.totalorder %s27, 1
        %p357 = pnand %p356, %p333
        %p358 = pneg %p357
        // Predicated region
        $region41: #{tpu_custom_call.1} parent=27 // pred_check
          _
        $region42: #{tpu_custom_call.1} parent=27 // pred_check_branch
          %360 = sbr.rel (%p357) target = $region44
        $region43: #{tpu_custom_call.1} parent=27 // pred_region
          %v361 = vld [vmem:[#allocation2] sm:$0xff]
          %362 = vst.msk [vmem:[%s3] sm:$0xff] %vm346, %v361
          %v363 = vld [vmem:[#allocation3] sm:$0xff]
          %364 = vst.msk [vmem:[%s4] sm:$0xff] %vm346, %v363
        $region44: #{tpu_custom_call.1} parent=27 // pred_fallthru
          _
        %s365 = sand.u32 %s94, 1
        %s366 = scalar_lea.sflag [#allocation6], %s365
        %s367 = sand.u32 %s94, 1
        %s368 = smul.addr %s367, 16
        %s369 = scalar_lea.vmem [#allocation9], %s368
        // Predicated region
        $region45: #{tpu_custom_call.1} parent=27 // pred_check
          %p370 = pneg %p104
        $region46: #{tpu_custom_call.1} parent=27 // pred_check_branch
          %372 = sbr.rel (%p370) target = $region48
        $region47: #{tpu_custom_call.1} parent=27 // pred_region
          %s373 = smul.u32 2, %s28
          %s375 = ssub.s32 256, 256
          %376 = vsyncadd %s366, %s375
          %s377 = smul.addr %s27, 2
          %s378 = sadd.s32 %s373, %s377
          %s379 = smul.addr %s378, 128
          %s380 = scalar_lea.hbm %s2, %s379
          %s382 = sshll.u32 %s369, 4
          %s383 = int_to_ptr.vmem [resolvable:$true] %s382
          %385 = dma.vmem_to_hbm [thread:$0]  %s383, 256, %s380, %s366
        $region48: #{tpu_custom_call.1} parent=27 // pred_fallthru
          _
        // Predicated region
        $region49: #{tpu_custom_call.1} parent=27 // pred_check
          %p386 = pneg %p125
        $region50: #{tpu_custom_call.1} parent=27 // pred_check_branch
          %388 = sbr.rel (%p386) target = $region52
        $region51: #{tpu_custom_call.1} parent=27 // pred_region
          _
        $region52: #{tpu_custom_call.1} parent=27 // pred_fallthru
          _
        // Predicated region
        $region53: #{tpu_custom_call.1} parent=27 // pred_check
          %p389 = pneg %p146
        $region54: #{tpu_custom_call.1} parent=27 // pred_check_branch
          %391 = sbr.rel (%p389) target = $region56
        $region55: #{tpu_custom_call.1} parent=27 // pred_region
          _
        $region56: #{tpu_custom_call.1} parent=27 // pred_fallthru
          _
        // Predicated region
        $region57: #{tpu_custom_call.1} parent=27 // pred_check
          %p392 = pneg %p125
        $region58: #{tpu_custom_call.1} parent=27 // pred_check_branch
          %394 = sbr.rel (%p392) target = $region60
        $region59: #{tpu_custom_call.1} parent=27 // pred_region
          _
        $region60: #{tpu_custom_call.1} parent=27 // pred_fallthru
          _
        // Predicated region
        $region61: #{tpu_custom_call.1} parent=27 // pred_check
          %p395 = pneg %p146
        $region62: #{tpu_custom_call.1} parent=27 // pred_check_branch
          %397 = sbr.rel (%p395) target = $region64
        $region63: #{tpu_custom_call.1} parent=27 // pred_region
          _
        $region64: #{tpu_custom_call.1} parent=27 // pred_fallthru
          _
      $region28: #{tpu_custom_call.1} parent=5 // pred_fallthru
        _
      %p398 = scmp.le.s32.totalorder 2, %s18
      // Predicated region
      $region65: #{tpu_custom_call.1} parent=5 // pred_check
        %p399 = pneg %p398
      $region66: #{tpu_custom_call.1} parent=5 // pred_check_branch
        %401 = sbr.rel (%p399) target = $region68
      $region67: #{tpu_custom_call.1} parent=5 // pred_region
        %s402 = ssub.s32 %s18, 2
        // Predicated region
        $region69: #{tpu_custom_call.1} parent=67 // pred_check
          %p403 = pneg %p110
        $region70: #{tpu_custom_call.1} parent=67 // pred_check_branch
          %405 = sbr.rel (%p403) target = $region72
        $region71: #{tpu_custom_call.1} parent=67 // pred_region
          %s406 = sand.u32 %s95, 1
          %s407 = scalar_lea.sflag [#allocation6], %s406
          %s408 = sand.u32 %s95, 1
          %s409 = smul.addr %s408, 16
          %s410 = scalar_lea.vmem [#allocation9], %s409
          %411 = dma.done %s407, 256
        $region72: #{tpu_custom_call.1} parent=67 // pred_fallthru
          _
      $region68: #{tpu_custom_call.1} parent=5 // pred_fallthru
        _
    $region6: #{tpu_custom_call.1} parent=1 // loop_footer
      %s22 = sadd.s32 1, %s18
    $region7: #{tpu_custom_call.1} parent=1 // loop_footer_branch
      %17 = sbr.rel target = $region3
    $region8: #{tpu_custom_call.1} parent=1 // loop_exit
      _
    %412 = vsyncpa [#allocation5], 1
    %s413 = scalar_lea.sflag [#allocation5], 1
    %414 = vsyncpa %s413, 1
    %415 = vsyncpa [#allocation8], 1
    %416 = vsyncpa [#allocation6], 1
    %s417 = scalar_lea.sflag [#allocation6], 1
    %418 = vsyncpa %s417, 1

</llo_original>
